<compile_context>
chip_gen: v5e
topology: v5e:2x2
jax: 0.10.0
libtpu: 0.0.40
codegen_flags: <defaults>
</compile_context>

<pallas_src>
import functools

import jax
import jax.numpy as jnp
from jax.experimental import pallas as pl
from jax.experimental.pallas import tpu as pltpu


def _round_up(x, m):
    return (x + m - 1) // m * m


def _sublane_align(*dtypes):
    """Second-minor alignment needed so blocks are native (32B/sublane) tiles."""
    a = 8
    for dt in dtypes:
        a = max(a, 32 // jnp.dtype(dt).itemsize)
    return a


# --------------------------------------------------------------------------
# Static packing layout (all Python ints, baked into the kernel as constants).
# Every section is padded to full 128-lane width and a 128-multiple row count
# so the kernel only ever sees (tile_b,128)x(128,128)-style full-lane tiles.
# --------------------------------------------------------------------------
def build_layout(obs_size, n_actions, hidden_size=128, middle_size=64, out_size=32):
    n_head = _round_up(max(n_actions, 1), 128)            # lane-dense head width
    pcols = _round_up(max(hidden_size, middle_size, out_size, n_head), 128)
    dims = [  # (name, in_features, out_features)
        ("l1", obs_size, hidden_size),
        ("l2", hidden_size, middle_size),
        ("l3", middle_size, middle_size),
        ("l4", middle_size, out_size),
        ("head", out_size, n_actions),
    ]
    sections, w_off = [], {}
    row = 0
    for idx, (name, fin, fout) in enumerate(dims):
        # Layer 1 contracts over the (lane-padded) observation; every later
        # layer contracts over the previous layer's full pcols-wide activation.
        fin_pad = _round_up(fin, 128) if idx == 0 else pcols
        w_off[name] = row
        row += fin_pad
        sections.append((name, fin, fout, fin_pad))
    b_off = {name: 8 * i for i, (name, _, _, _) in enumerate(sections)}
    return dict(sections=sections, w_off=w_off, w_rows=row,
                b_off=b_off, b_rows=8 * len(sections),
                pcols=pcols, n_head=n_head, n_actions=n_actions,
                obs_size=obs_size, obs_pad=sections[0][3])


# --------------------------------------------------------------------------
# Parameter packing: fold the dueling heads, concatenate everything into one
# weight slab (param_dtype) + one small f32 bias slab.  Done once, offline.
# --------------------------------------------------------------------------
def pack_params(params, layout, param_dtype=jnp.bfloat16):
    # Fold value head + advantage head + dueling combine into a single linear.
    wv, bv = params["wv"], params["bv"]                     # (out,1), (1,1)
    wa, ba = params["wa"], params["ba"]                     # (out,A), (1,A)
    w_head = wv + wa - jnp.mean(wa, axis=1, keepdims=True)  # (out, A)
    b_head = bv + ba - jnp.mean(ba, axis=1, keepdims=True)  # (1, A)

    mats = {
        "l1": (params["w1"], params["b1"]),
        "l2": (params["w2"], params["b2"]),
        "l3": (params["w3"], params["b3"]),
        "l4": (params["w4"], params["b4"]),
        "head": (w_head, b_head),
    }

    w_slab = jnp.zeros((layout["w_rows"], layout["pcols"]), jnp.float32)
    b_slab = jnp.zeros((layout["b_rows"], layout["pcols"]), jnp.float32)
    for name, fin, _fout, _fin_pad in layout["sections"]:
        w, b = mats[name]
        fout = w.shape[1]
        wo, bo = layout["w_off"][name], layout["b_off"][name]
        w_slab = w_slab.at[wo:wo + fin, :fout].set(w)       # padding stays 0
        b_slab = b_slab.at[bo:bo + 1, :fout].set(b)
    return w_slab.astype(param_dtype), b_slab


# --------------------------------------------------------------------------
# Kernel: whole MLP for one batch tile.  Params are single resident VMEM
# slabs sliced with static 128-aligned offsets (zero-cost full-lane views).
# --------------------------------------------------------------------------
def _dueling_dqn_kernel(x_ref, w_ref, b_ref, out_ref, *, layout):
    wdt = w_ref.dtype
    w_off, b_off = layout["w_off"], layout["b_off"]
    sections = layout["sections"]
    n_layers = len(sections)

    h = x_ref[...]                                    # (tile_b, obs_pad), already wdt
    for idx, (name, _fin, _fout, fin_pad) in enumerate(sections):
        wo, bo = w_off[name], b_off[name]
        w = w_ref[wo:wo + fin_pad, :]                 # (fin_pad, 128) full-lane view
        b = b_ref[bo:bo + 1, :]                       # (1, 128) f32 bias row
        z = jnp.dot(h, w, preferred_element_type=jnp.float32) + b   # MXU, f32 acc
        if idx < n_layers - 1:
            # ReLU + bias add in f32 on the VPU (v5e-safe); cast only for MXU.
            h = jnp.maximum(z, 0.0).astype(wdt)
        else:
            # Lane-dense head store (padded to 128 cols); wrapper slices actions.
            out_ref[...] = z.astype(out_ref.dtype)


# --------------------------------------------------------------------------
# Wrapper: batch-tiled grid, params resident across steps.
# --------------------------------------------------------------------------
def branch_dueling_dqn_forward(x, w_slab, b_slab, layout, *, tile_b=2048,
                               out_dtype=jnp.bfloat16, return_padded=False):
    batch, obs_size = x.shape
    assert obs_size == layout["obs_size"]
    pcols, obs_pad = layout["pcols"], layout["obs_pad"]
    wdt = w_slab.dtype

    # Stream x in the MXU operand dtype (kernel would quantize anyway).
    x_k = x.astype(wdt)

    # --- choose batch tiling ------------------------------------------------
    align = _sublane_align(wdt, out_dtype)
    b_aligned = _round_up(batch, align)
    # >=2 grid steps whenever the batch allows it (keeps both v7x TCs busy),
    # and a tile that divides the padded batch (minimal padding waste).
    min_steps = 2 if b_aligned >= 2 * align else 1
    n_steps = max(pl.cdiv(b_aligned, max(tile_b, align)), min_steps)
    tb = _round_up(pl.cdiv(b_aligned, n_steps), align)
    b_padded = n_steps * tb

    # Zero-pad batch rows and observation lanes (exact: padded weight rows are 0).
    x_k = jnp.pad(x_k, ((0, b_padded - batch), (0, obs_pad - obs_size)))

    # --- VMEM budget (explicit limit so huge tiles also compile on v5e) ------
    isz = lambda dt: jnp.dtype(dt).itemsize
    x_tile_bytes = tb * obs_pad * isz(wdt)
    out_tile_bytes = tb * pcols * isz(out_dtype)
    param_bytes = int(w_slab.size) * isz(wdt) + int(b_slab.size) * 4
    need = 2 * (x_tile_bytes + out_tile_bytes) + 2 * param_bytes + (4 << 20)
    vmem_limit = int(min(max(need, 32 << 20), 64 << 20))

    kernel = functools.partial(_dueling_dqn_kernel, layout=layout)
    out = pl.pallas_call(
        kernel,
        out_shape=jax.ShapeDtypeStruct((b_padded, pcols), out_dtype),
        grid_spec=pltpu.PrefetchScalarGridSpec(
            num_scalar_prefetch=0,
            grid=(n_steps,),
            in_specs=[
                pl.BlockSpec((tb, obs_pad), lambda i: (i, 0)),
                # constant index maps -> packed params stay VMEM-resident
                pl.BlockSpec((layout["w_rows"], pcols), lambda i: (0, 0)),
                pl.BlockSpec((layout["b_rows"], pcols), lambda i: (0, 0)),
            ],
            out_specs=pl.BlockSpec((tb, pcols), lambda i: (i, 0)),
        ),
        compiler_params=pltpu.CompilerParams(
            dimension_semantics=("parallel",),      # megacore sharding on v7x
            vmem_limit_bytes=vmem_limit,
        ),
    )(x_k, w_slab, b_slab)

    if return_padded:
        return out      # (b_padded, 128) lane-dense block; consumer slices lazily
    return out[:batch, :layout["n_actions"]]


# --------------------------------------------------------------------------
# Init + references
# --------------------------------------------------------------------------
def init_params(key, obs_size, n_actions, hidden_size=128, middle_size=64, out_size=32):
    """PyTorch-style uniform(-1/sqrt(fan_in), 1/sqrt(fan_in)) init.
    Weights stored pre-transposed as (in, out); biases as (1, out)."""
    dims = [
        ("w1", "b1", obs_size, hidden_size),
        ("w2", "b2", hidden_size, middle_size),
        ("w3", "b3", middle_size, middle_size),
        ("w4", "b4", middle_size, out_size),
        ("wv", "bv", out_size, 1),
        ("wa", "ba", out_size, n_actions),
    ]
    params = {}
    for wname, bname, fan_in, fan_out in dims:
        key, kw, kb = jax.random.split(key, 3)
        bound = 1.0 / jnp.sqrt(jnp.float32(fan_in))
        params[wname] = jax.random.uniform(kw, (fan_in, fan_out), jnp.float32,
                                           minval=-bound, maxval=bound)
        params[bname] = jax.random.uniform(kb, (1, fan_out), jnp.float32,
                                           minval=-bound, maxval=bound)
    return params


def reference_forward_unfused(x, p):
    """Plain-JAX reference reproducing the original PyTorch f32 forward."""
    dot = functools.partial(jnp.dot, precision=jax.lax.Precision.HIGHEST)
    h = x.astype(jnp.float32)
    h = jnp.maximum(dot(h, p["w1"]) + p["b1"], 0.0)
    h = jnp.maximum(dot(h, p["w2"]) + p["b2"], 0.0)
    h = jnp.maximum(dot(h, p["w3"]) + p["b3"], 0.0)
    f = jnp.maximum(dot(h, p["w4"]) + p["b4"], 0.0)
    v = dot(f, p["wv"]) + p["bv"]
    a = dot(f, p["wa"]) + p["ba"]
    return v + a - jnp.mean(a, axis=-1, keepdims=True)


def reference_forward_packed(x, w_slab, b_slab, layout, out_dtype=jnp.bfloat16):
    """Reference consuming the same packed (possibly bf16) params the kernel
    sees, mirroring its mixed-precision numerics (f32 acc, wdt MXU operands)."""
    wdt = w_slab.dtype
    dot = functools.partial(jnp.dot, precision=jax.lax.Precision.HIGHEST)
    sections = layout["sections"]
    obs_pad = layout["obs_pad"]
    h = jnp.pad(x.astype(wdt), ((0, 0), (0, obs_pad - x.shape[1]))).astype(jnp.float32)
    z = None
    for i, (name, _fin, _fout, fin_pad) in enumerate(sections):
        wo, bo = layout["w_off"][name], layout["b_off"][name]
        w = w_slab[wo:wo + fin_pad, :].astype(jnp.float32)
        b = b_slab[bo:bo + 1, :]
        z = dot(h, w) + b
        if i < len(sections) - 1:
            h = jnp.maximum(z, 0.0).astype(wdt).astype(jnp.float32)
    return z[:, :layout["n_actions"]].astype(out_dtype)


# --------------------------------------------------------------------------
if __name__ == "__main__":
    key = jax.random.PRNGKey(0)
    kx1, kx2, kx3, kp1, kp2 = jax.random.split(key, 5)

    batch, obs_size, n_actions = 8, 32, 8
    params = init_params(kp1, obs_size, n_actions)
    layout = build_layout(obs_size, n_actions)
    # Default fast path: bf16 weight slab (full-rate MXU on v6e/v7x, f32 acc).
    w_slab, b_slab = pack_params(params, layout, param_dtype=jnp.bfloat16)

    x = jax.random.normal(kx1, (batch, obs_size), dtype=jnp.float32)

    # (1) Default path: bf16 params, bf16 lane-dense output.
    out = jax.block_until_ready(branch_dueling_dqn_forward(x, w_slab, b_slab, layout))
    assert out.shape == (batch, n_actions) and out.dtype == jnp.bfloat16
    ref = reference_forward_packed(x, w_slab, b_slab, layout, out_dtype=jnp.bfloat16)
    assert jnp.allclose(out.astype(jnp.float32), ref.astype(jnp.float32),
                        atol=2e-2, rtol=2e-2), "kernel mismatch vs matched-precision reference"

    # (2) Semantics check vs. the original (unfused, f32) PyTorch-style math;
    #     loose tolerance only covers the bf16 weight/output quantization.
    ref_f32 = reference_forward_unfused(x, params)
    assert jnp.allclose(out.astype(jnp.float32), ref_f32, atol=1e-1, rtol=1e-1), \
        "kernel diverges from original module semantics"

    # (3) f32-output path (tighter numerics check of the fused dueling math).
    out32 = jax.block_until_ready(
        branch_dueling_dqn_forward(x, w_slab, b_slab, layout, out_dtype=jnp.float32))
    ref32 = reference_forward_packed(x, w_slab, b_slab, layout, out_dtype=jnp.float32)
    assert out32.dtype == jnp.float32
    assert jnp.allclose(out32, ref32, atol=2e-3, rtol=2e-3), "f32-output path mismatch"

    # (4) Multi-step batch grid (>=2 steps, resident params) with an odd batch.
    x_big = jax.random.normal(kx2, (33, obs_size), dtype=jnp.float32)
    out_big = jax.block_until_ready(
        branch_dueling_dqn_forward(x_big, w_slab, b_slab, layout, tile_b=16))
    ref_big = reference_forward_packed(x_big, w_slab, b_slab, layout)
    assert out_big.shape == (33, n_actions)
    assert jnp.allclose(out_big.astype(jnp.float32), ref_big.astype(jnp.float32),
                        atol=2e-2, rtol=2e-2), "grid-tiled path mismatch"

    # (5) Non-multiple-of-8 obs_size / n_actions / batch (exercise padding).
    obs2, act2, b2 = 20, 6, 19
    params2 = init_params(kp2, obs2, act2)
    layout2 = build_layout(obs2, act2)
    w2, bb2 = pack_params(params2, layout2, param_dtype=jnp.bfloat16)
    x2 = jax.random.normal(kx3, (b2, obs2), dtype=jnp.float32)
    o2 = jax.block_until_ready(branch_dueling_dqn_forward(x2, w2, bb2, layout2))
    r2 = reference_forward_packed(x2, w2, bb2, layout2)
    assert o2.shape == (b2, act2)
    assert jnp.allclose(o2.astype(jnp.float32), r2.astype(jnp.float32),
                        atol=2e-2, rtol=2e-2), "odd-shape padding path mismatch"

    print("KERNEL_OK")
</pallas_src>

<mosaic_0001>
module attributes {stable_mosaic.version = 11 : i64} {
  func.func @_dueling_dqn_kernel(%arg0: i32, %arg1: memref<16x128xbf16, #tpu.memory_space<vmem>>, %arg2: memref<640x128xbf16, #tpu.memory_space<vmem>>, %arg3: memref<40x128xf32, #tpu.memory_space<vmem>>, %arg4: memref<16x128xbf16, #tpu.memory_space<vmem>>) attributes {dimension_semantics = [#tpu.dimension_semantics<parallel>], iteration_bounds = array<i64: 1>, scalar_prefetch = 0 : i64, scratch_operands = 0 : i64, tpu.core_type = #tpu.core_type<tc>, window_params = [{transform_indices = @transform_0, window_bounds = array<i64: 16, 128>}, {pipeline_mode = #tpu.pipeline_mode<synchronous>, transform_indices = @transform_1, window_bounds = array<i64: 640, 128>}, {pipeline_mode = #tpu.pipeline_mode<synchronous>, transform_indices = @transform_2, window_bounds = array<i64: 40, 128>}, {transform_indices = @transform_3, window_bounds = array<i64: 16, 128>}]} {
    %c0 = arith.constant 0 : index
    %c0_0 = arith.constant 0 : index
    %0 = vector.load %arg1[%c0, %c0_0] : memref<16x128xbf16, #tpu.memory_space<vmem>>, vector<16x128xbf16>
    %c0_1 = arith.constant 0 : index
    %c0_2 = arith.constant 0 : index
    %1 = vector.load %arg2[%c0_1, %c0_2] : memref<640x128xbf16, #tpu.memory_space<vmem>>, vector<128x128xbf16>
    %c0_3 = arith.constant 0 : index
    %c0_4 = arith.constant 0 : index
    %2 = vector.load %arg3[%c0_3, %c0_4] : memref<40x128xf32, #tpu.memory_space<vmem>>, vector<1x128xf32>
    %cst = arith.constant dense<0.000000e+00> : vector<16x128xf32>
    %3 = tpu.matmul %0, %1, %cst {dimension_numbers = #tpu.dot_dimension_numbers<[1], [0], [0], [1], [0, 0, 1, 1], [], []>} : vector<16x128xbf16>, vector<128x128xbf16>, vector<16x128xf32> -> vector<16x128xf32>
    %4 = vector.broadcast %2 : vector<1x128xf32> to vector<16x128xf32>
    %5 = arith.addf %3, %4 : vector<16x128xf32>
    %cst_5 = arith.constant 0.000000e+00 : f32
    %6 = vector.broadcast %cst_5 : f32 to vector<16x128xf32>
    %7 = arith.maximumf %5, %6 : vector<16x128xf32>
    %8 = arith.truncf %7 : vector<16x128xf32> to vector<16x128xbf16>
    %c128 = arith.constant 128 : index
    %c0_6 = arith.constant 0 : index
    %9 = vector.load %arg2[%c128, %c0_6] : memref<640x128xbf16, #tpu.memory_space<vmem>>, vector<128x128xbf16>
    %c8 = arith.constant 8 : index
    %c0_7 = arith.constant 0 : index
    %10 = vector.load %arg3[%c8, %c0_7] : memref<40x128xf32, #tpu.memory_space<vmem>>, vector<1x128xf32>
    %cst_8 = arith.constant dense<0.000000e+00> : vector<16x128xf32>
    %11 = tpu.matmul %8, %9, %cst_8 {dimension_numbers = #tpu.dot_dimension_numbers<[1], [0], [0], [1], [0, 0, 1, 1], [], []>} : vector<16x128xbf16>, vector<128x128xbf16>, vector<16x128xf32> -> vector<16x128xf32>
    %12 = vector.broadcast %10 : vector<1x128xf32> to vector<16x128xf32>
    %13 = arith.addf %11, %12 : vector<16x128xf32>
    %cst_9 = arith.constant 0.000000e+00 : f32
    %14 = vector.broadcast %cst_9 : f32 to vector<16x128xf32>
    %15 = arith.maximumf %13, %14 : vector<16x128xf32>
    %16 = arith.truncf %15 : vector<16x128xf32> to vector<16x128xbf16>
    %c256 = arith.constant 256 : index
    %c0_10 = arith.constant 0 : index
    %17 = vector.load %arg2[%c256, %c0_10] : memref<640x128xbf16, #tpu.memory_space<vmem>>, vector<128x128xbf16>
    %c16 = arith.constant 16 : index
    %c0_11 = arith.constant 0 : index
    %18 = vector.load %arg3[%c16, %c0_11] : memref<40x128xf32, #tpu.memory_space<vmem>>, vector<1x128xf32>
    %cst_12 = arith.constant dense<0.000000e+00> : vector<16x128xf32>
    %19 = tpu.matmul %16, %17, %cst_12 {dimension_numbers = #tpu.dot_dimension_numbers<[1], [0], [0], [1], [0, 0, 1, 1], [], []>} : vector<16x128xbf16>, vector<128x128xbf16>, vector<16x128xf32> -> vector<16x128xf32>
    %20 = vector.broadcast %18 : vector<1x128xf32> to vector<16x128xf32>
    %21 = arith.addf %19, %20 : vector<16x128xf32>
    %cst_13 = arith.constant 0.000000e+00 : f32
    %22 = vector.broadcast %cst_13 : f32 to vector<16x128xf32>
    %23 = arith.maximumf %21, %22 : vector<16x128xf32>
    %24 = arith.truncf %23 : vector<16x128xf32> to vector<16x128xbf16>
    %c384 = arith.constant 384 : index
    %c0_14 = arith.constant 0 : index
    %25 = vector.load %arg2[%c384, %c0_14] : memref<640x128xbf16, #tpu.memory_space<vmem>>, vector<128x128xbf16>
    %c24 = arith.constant 24 : index
    %c0_15 = arith.constant 0 : index
    %26 = vector.load %arg3[%c24, %c0_15] : memref<40x128xf32, #tpu.memory_space<vmem>>, vector<1x128xf32>
    %cst_16 = arith.constant dense<0.000000e+00> : vector<16x128xf32>
    %27 = tpu.matmul %24, %25, %cst_16 {dimension_numbers = #tpu.dot_dimension_numbers<[1], [0], [0], [1], [0, 0, 1, 1], [], []>} : vector<16x128xbf16>, vector<128x128xbf16>, vector<16x128xf32> -> vector<16x128xf32>
    %28 = vector.broadcast %26 : vector<1x128xf32> to vector<16x128xf32>
    %29 = arith.addf %27, %28 : vector<16x128xf32>
    %cst_17 = arith.constant 0.000000e+00 : f32
    %30 = vector.broadcast %cst_17 : f32 to vector<16x128xf32>
    %31 = arith.maximumf %29, %30 : vector<16x128xf32>
    %32 = arith.truncf %31 : vector<16x128xf32> to vector<16x128xbf16>
    %c512 = arith.constant 512 : index
    %c0_18 = arith.constant 0 : index
    %33 = vector.load %arg2[%c512, %c0_18] : memref<640x128xbf16, #tpu.memory_space<vmem>>, vector<128x128xbf16>
    %c32 = arith.constant 32 : index
    %c0_19 = arith.constant 0 : index
    %34 = vector.load %arg3[%c32, %c0_19] : memref<40x128xf32, #tpu.memory_space<vmem>>, vector<1x128xf32>
    %cst_20 = arith.constant dense<0.000000e+00> : vector<16x128xf32>
    %35 = tpu.matmul %32, %33, %cst_20 {dimension_numbers = #tpu.dot_dimension_numbers<[1], [0], [0], [1], [0, 0, 1, 1], [], []>} : vector<16x128xbf16>, vector<128x128xbf16>, vector<16x128xf32> -> vector<16x128xf32>
    %36 = vector.broadcast %34 : vector<1x128xf32> to vector<16x128xf32>
    %37 = arith.addf %35, %36 : vector<16x128xf32>
    %38 = arith.truncf %37 : vector<16x128xf32> to vector<16x128xbf16>
    %c0_21 = arith.constant 0 : index
    %c0_22 = arith.constant 0 : index
    %39 = vector.load %arg4[%c0_21, %c0_22] : memref<16x128xbf16, #tpu.memory_space<vmem>>, vector<16x128xbf16>
    tpu.vector_store %arg4[%c0_21, %c0_22], %38 {strides = array<i32>} : memref<16x128xbf16, #tpu.memory_space<vmem>>, vector<16x128xbf16>,
    return
  }
  func.func @transform_0(%arg0: i32) -> (i32, i32) {
    %c0_i32 = arith.constant 0 : i32
    %c0_i32_0 = arith.constant 0 : i32
    return %arg0, %c0_i32 : i32, i32
  }
  func.func @transform_1(%arg0: i32) -> (i32, i32) {
    %c0_i32 = arith.constant 0 : i32
    %c0_i32_0 = arith.constant 0 : i32
    %c0_i32_1 = arith.constant 0 : i32
    return %c0_i32, %c0_i32_0 : i32, i32
  }
  func.func @transform_2(%arg0: i32) -> (i32, i32) {
    %c0_i32 = arith.constant 0 : i32
    %c0_i32_0 = arith.constant 0 : i32
    %c0_i32_1 = arith.constant 0 : i32
    return %c0_i32, %c0_i32_0 : i32, i32
  }
  func.func @transform_3(%arg0: i32) -> (i32, i32) {
    %c0_i32 = arith.constant 0 : i32
    %c0_i32_0 = arith.constant 0 : i32
    return %arg0, %c0_i32 : i32, i32
  }
}

</mosaic_0001>

<llo_original>
// kernel: tpu_custom_call.1
$region0: #{tpu_custom_call.1}
  #allocation0 [shape = 'u32[]', space=smem, size = 0x4, offset = 0x4, fixed_abs, tag = 'smem constant byte address 0x4 - core index']
  #allocation1 [shape = 'u32[72,128]{1,0:T(1,128)}', space=vmem, size = 0x9000, scoped, tag = 'internal scratch']
  %s0 = inlined_call_operand.hbm [shape: bf16[16,128], index: 0, kind: input, shape index: {}]
  %s1 = inlined_call_operand.hbm [shape: bf16[640,128], index: 1, kind: input, shape index: {}]
  %s2 = inlined_call_operand.hbm [shape: f32[40,128], index: 2, kind: input, shape index: {}]
  %s3 = inlined_call_operand.hbm [shape: bf16[16,128], index: 3, kind: output, shape index: {}]
  %s4 = sld [smem:[#allocation0]]
  $region34: #{tpu_custom_call.1} parent=0
    _
  %s6 = ssub.s32 1, %s4
  %s7 = scalar_select 0, %s6, %s4
  $region1: #{tpu_custom_call.1} parent=0
    #allocation2 [shape = 'u8[4096]{0}', space=vmem, size = 0x1000, scoped, tag = 'input window, operand 0, single buffered']
    #allocation3 [shape = 's32[1]{0}', space=sflag, size = 0x4, scoped, tag = 'scoped memory for tpu_custom_call.1']
    #allocation4 [shape = 's32[1]{0}', space=sflag, size = 0x4, scoped, tag = 'scoped memory for tpu_custom_call.1']
    #allocation5 [shape = 'u8[163840]{0}', space=vmem, size = 0x28000, scoped, tag = 'input window, operand 1, single buffered']
    #allocation6 [shape = 's32[1]{0}', space=sflag, size = 0x4, scoped, tag = 'scoped memory for tpu_custom_call.1']
    #allocation7 [shape = 'u8[20480]{0}', space=vmem, size = 0x5000, scoped, tag = 'input window, operand 2, single buffered']
    #allocation8 [shape = 'u8[4096]{0}', space=vmem, size = 0x1000, scoped, tag = 'output window, operand 0, single buffered']
    %8 = vsyncpa [#allocation3], 0
    %9 = vsyncpa [#allocation6], 0
    %10 = vsyncpa [#allocation4], 0
    // Predicated region
    $region2: #{tpu_custom_call.1} parent=1 // pred_check
      _
    $region3: #{tpu_custom_call.1} parent=1 // pred_check_branch
      %12 = sbr.rel (0) target = $region5
    $region4: #{tpu_custom_call.1} parent=1 // pred_region
      %14 = vsyncadd [#allocation3], 0
      %s15 = sshll.u32 %s0, 4
      %s16 = int_to_ptr.hbm [resolvable:$true] %s15
      %s17 = sshll.u32 [#allocation2], 4
      %s18 = int_to_ptr.vmem [resolvable:$true] %s17
      %23 = dma.hbm_to_vmem [thread:$0]  %s16, 128, %s18, [#allocation3], 64, 64, 4
    $region5: #{tpu_custom_call.1} parent=1 // pred_fallthru
      _
    // Predicated region
    $region6: #{tpu_custom_call.1} parent=1 // pred_check
      _
    $region7: #{tpu_custom_call.1} parent=1 // pred_check_branch
      %25 = sbr.rel (0) target = $region9
    $region8: #{tpu_custom_call.1} parent=1 // pred_region
      %27 = vsyncadd [#allocation6], 0
      %s28 = sshll.u32 %s1, 4
      %s29 = int_to_ptr.hbm [resolvable:$true] %s28
      %s30 = sshll.u32 [#allocation5], 4
      %s31 = int_to_ptr.vmem [resolvable:$true] %s30
      %36 = dma.hbm_to_vmem [thread:$0]  %s29, 5120, %s31, [#allocation6], 64, 64, 4
    $region9: #{tpu_custom_call.1} parent=1 // pred_fallthru
      _
    // Predicated region
    $region10: #{tpu_custom_call.1} parent=1 // pred_check
      _
    $region11: #{tpu_custom_call.1} parent=1 // pred_check_branch
      %38 = sbr.rel (0) target = $region13
    $region12: #{tpu_custom_call.1} parent=1 // pred_region
      %40 = vsyncadd [#allocation6], 0
      %s41 = sshll.u32 %s2, 4
      %s42 = int_to_ptr.hbm [resolvable:$true] %s41
      %s43 = sshll.u32 [#allocation7], 4
      %s44 = int_to_ptr.vmem [resolvable:$true] %s43
      %49 = dma.hbm_to_vmem [thread:$0]  %s42, 640, %s44, [#allocation6], 128, 128, 8
    $region13: #{tpu_custom_call.1} parent=1 // pred_fallthru
      _
    // Predicated region
    $region14: #{tpu_custom_call.1} parent=1 // pred_check
      _
    $region15: #{tpu_custom_call.1} parent=1 // pred_check_branch
      %51 = sbr.rel (0) target = $region17
    $region16: #{tpu_custom_call.1} parent=1 // pred_region
      %53 = dma.done [#allocation3], 128
    $region17: #{tpu_custom_call.1} parent=1 // pred_fallthru
      _
    // Predicated region
    $region18: #{tpu_custom_call.1} parent=1 // pred_check
      _
    $region19: #{tpu_custom_call.1} parent=1 // pred_check_branch
      %55 = sbr.rel (0) target = $region21
    $region20: #{tpu_custom_call.1} parent=1 // pred_region
      %57 = dma.done [#allocation6], 5120
    $region21: #{tpu_custom_call.1} parent=1 // pred_fallthru
      _
    // Predicated region
    $region22: #{tpu_custom_call.1} parent=1 // pred_check
      _
    $region23: #{tpu_custom_call.1} parent=1 // pred_check_branch
      %59 = sbr.rel (0) target = $region25
    $region24: #{tpu_custom_call.1} parent=1 // pred_region
      %61 = dma.done [#allocation6], 640
    $region25: #{tpu_custom_call.1} parent=1 // pred_fallthru
      _
    %v62 = vld [vmem:[#allocation2] sm:$0xf]
    %v63 = vld [vmem:[#allocation2 + $0x4] sm:$0xf]
    %v64 = vld [vmem:[#allocation5] sm:$0xf]
    %v65 = vld [vmem:[#allocation5 + $0x4] sm:$0xf]
    %v66 = vld [vmem:[#allocation5 + $0x8] sm:$0xf]
    %v67 = vld [vmem:[#allocation5 + $0xc] sm:$0xf]
    %v68 = vld [vmem:[#allocation5 + $0x10] sm:$0xf]
    %v69 = vld [vmem:[#allocation5 + $0x14] sm:$0xf]
    %v70 = vld [vmem:[#allocation5 + $0x18] sm:$0xf]
    %v71 = vld [vmem:[#allocation5 + $0x1c] sm:$0xf]
    %v72 = vld [vmem:[#allocation5 + $0x20] sm:$0xf]
    %v73 = vld [vmem:[#allocation5 + $0x24] sm:$0xf]
    %v74 = vld [vmem:[#allocation5 + $0x28] sm:$0xf]
    %v75 = vld [vmem:[#allocation5 + $0x2c] sm:$0xf]
    %v76 = vld [vmem:[#allocation5 + $0x30] sm:$0xf]
    %v77 = vld [vmem:[#allocation5 + $0x34] sm:$0xf]
    %v78 = vld [vmem:[#allocation5 + $0x38] sm:$0xf]
    %v79 = vld [vmem:[#allocation5 + $0x3c] sm:$0xf]
    %v80 = vld [vmem:[#allocation7] sm:$0x1]
    %v81 = vperm.slane %v80, 0
    %v84 = vunpack.c.l.b16 %v62
    %v85 = vunpack.c.l.b16 %v63
    %v86 = vpack.c.b16 %v85, %v84
    %v104 = vunpack.c.l.b16 %v64
    %v105 = vunpack.c.l.b16 %v65
    %v106 = vunpack.c.l.b16 %v66
    %v107 = vunpack.c.l.b16 %v67
    %v108 = vunpack.c.l.b16 %v68
    %v109 = vunpack.c.l.b16 %v69
    %v110 = vunpack.c.l.b16 %v70
    %v111 = vunpack.c.l.b16 %v71
    %v112 = vunpack.c.l.b16 %v72
    %v113 = vunpack.c.l.b16 %v73
    %v114 = vunpack.c.l.b16 %v74
    %v115 = vunpack.c.l.b16 %v75
    %v116 = vunpack.c.l.b16 %v76
    %v117 = vunpack.c.l.b16 %v77
    %v118 = vunpack.c.l.b16 %v78
    %v119 = vunpack.c.l.b16 %v79
    %v120 = vpack.c.b16 %v105, %v104
    %v121 = vpack.c.b16 %v107, %v106
    %v122 = vpack.c.b16 %v109, %v108
    %v123 = vpack.c.b16 %v111, %v110
    %v124 = vpack.c.b16 %v113, %v112
    %v125 = vpack.c.b16 %v115, %v114
    %v126 = vpack.c.b16 %v117, %v116
    %v127 = vpack.c.b16 %v119, %v118
    %136 = vmatpush.bf16.msra.mxu0 %v127
    %137 = vmatpush.bf16.msra.mxu0 %v126
    %138 = vmatpush.bf16.msra.mxu0 %v125
    %139 = vmatpush.bf16.msra.mxu0 %v124
    %140 = vmatpush.bf16.msra.mxu0 %v123
    %141 = vmatpush.bf16.msra.mxu0 %v122
    %142 = vmatpush.bf16.msra.mxu0 %v121
    %143 = vmatpush.bf16.msra.mxu0 %v120
    %144 = vmatmul.bf16.gmra.mxu0 %v86
    %v145 = vpop.f32.mrf.mxu0
    %v146 = vadd.f32 %v81, %v145
    %v147 = vpop.f32.mrf.mxu0
    %v148 = vadd.f32 %v81, %v147
    %149 = vdwg.mxu0
    %v150 = vmax.f32 %v146, 0.0
    %v151 = vmax.f32 %v148, 0.0
    %v152 = vpack.c.bf16 %v151, %v150
    %v153 = vld [vmem:[#allocation5 + $0x40] sm:$0xf]
    %v154 = vld [vmem:[#allocation5 + $0x44] sm:$0xf]
    %v155 = vld [vmem:[#allocation5 + $0x48] sm:$0xf]
    %v156 = vld [vmem:[#allocation5 + $0x4c] sm:$0xf]
    %v157 = vld [vmem:[#allocation5 + $0x50] sm:$0xf]
    %v158 = vld [vmem:[#allocation5 + $0x54] sm:$0xf]
    %v159 = vld [vmem:[#allocation5 + $0x58] sm:$0xf]
    %v160 = vld [vmem:[#allocation5 + $0x5c] sm:$0xf]
    %v161 = vld [vmem:[#allocation5 + $0x60] sm:$0xf]
    %v162 = vld [vmem:[#allocation5 + $0x64] sm:$0xf]
    %v163 = vld [vmem:[#allocation5 + $0x68] sm:$0xf]
    %v164 = vld [vmem:[#allocation5 + $0x6c] sm:$0xf]
    %v165 = vld [vmem:[#allocation5 + $0x70] sm:$0xf]
    %v166 = vld [vmem:[#allocation5 + $0x74] sm:$0xf]
    %v167 = vld [vmem:[#allocation5 + $0x78] sm:$0xf]
    %v168 = vld [vmem:[#allocation5 + $0x7c] sm:$0xf]
    %v169 = vld [vmem:[#allocation7 + $0x8] sm:$0x1]
    %v170 = vperm.slane %v169, 0
    %v187 = vunpack.c.l.b16 %v153
    %v188 = vunpack.c.l.b16 %v154
    %v189 = vunpack.c.l.b16 %v155
    %v190 = vunpack.c.l.b16 %v156
    %v191 = vunpack.c.l.b16 %v157
    %v192 = vunpack.c.l.b16 %v158
    %v193 = vunpack.c.l.b16 %v159
    %v194 = vunpack.c.l.b16 %v160
    %v195 = vunpack.c.l.b16 %v161
    %v196 = vunpack.c.l.b16 %v162
    %v197 = vunpack.c.l.b16 %v163
    %v198 = vunpack.c.l.b16 %v164
    %v199 = vunpack.c.l.b16 %v165
    %v200 = vunpack.c.l.b16 %v166
    %v201 = vunpack.c.l.b16 %v167
    %v202 = vunpack.c.l.b16 %v168
    %v203 = vpack.c.b16 %v188, %v187
    %v204 = vpack.c.b16 %v190, %v189
    %v205 = vpack.c.b16 %v192, %v191
    %v206 = vpack.c.b16 %v194, %v193
    %v207 = vpack.c.b16 %v196, %v195
    %v208 = vpack.c.b16 %v198, %v197
    %v209 = vpack.c.b16 %v200, %v199
    %v210 = vpack.c.b16 %v202, %v201
    %219 = vmatpush.bf16.msra.mxu0 %v210
    %220 = vmatpush.bf16.msra.mxu0 %v209
    %221 = vmatpush.bf16.msra.mxu0 %v208
    %222 = vmatpush.bf16.msra.mxu0 %v207
    %223 = vmatpush.bf16.msra.mxu0 %v206
    %224 = vmatpush.bf16.msra.mxu0 %v205
    %225 = vmatpush.bf16.msra.mxu0 %v204
    %226 = vmatpush.bf16.msra.mxu0 %v203
    %227 = vmatmul.bf16.gmra.mxu0 %v152
    %v228 = vpop.f32.mrf.mxu0
    %v229 = vadd.f32 %v170, %v228
    %v230 = vpop.f32.mrf.mxu0
    %v231 = vadd.f32 %v170, %v230
    %232 = vdwg.mxu0
    %v233 = vmax.f32 %v229, 0.0
    %v234 = vmax.f32 %v231, 0.0
    %v235 = vpack.c.bf16 %v234, %v233
    %v236 = vld [vmem:[#allocation5 + $0x80] sm:$0xf]
    %v237 = vld [vmem:[#allocation5 + $0x84] sm:$0xf]
    %v238 = vld [vmem:[#allocation5 + $0x88] sm:$0xf]
    %v239 = vld [vmem:[#allocation5 + $0x8c] sm:$0xf]
    %v240 = vld [vmem:[#allocation5 + $0x90] sm:$0xf]
    %v241 = vld [vmem:[#allocation5 + $0x94] sm:$0xf]
    %v242 = vld [vmem:[#allocation5 + $0x98] sm:$0xf]
    %v243 = vld [vmem:[#allocation5 + $0x9c] sm:$0xf]
    %v244 = vld [vmem:[#allocation5 + $0xa0] sm:$0xf]
    %v245 = vld [vmem:[#allocation5 + $0xa4] sm:$0xf]
    %v246 = vld [vmem:[#allocation5 + $0xa8] sm:$0xf]
    %v247 = vld [vmem:[#allocation5 + $0xac] sm:$0xf]
    %v248 = vld [vmem:[#allocation5 + $0xb0] sm:$0xf]
    %v249 = vld [vmem:[#allocation5 + $0xb4] sm:$0xf]
    %v250 = vld [vmem:[#allocation5 + $0xb8] sm:$0xf]
    %v251 = vld [vmem:[#allocation5 + $0xbc] sm:$0xf]
    %v252 = vld [vmem:[#allocation7 + $0x10] sm:$0x1]
    %v253 = vperm.slane %v252, 0
    %v270 = vunpack.c.l.b16 %v236
    %v271 = vunpack.c.l.b16 %v237
    %v272 = vunpack.c.l.b16 %v238
    %v273 = vunpack.c.l.b16 %v239
    %v274 = vunpack.c.l.b16 %v240
    %v275 = vunpack.c.l.b16 %v241
    %v276 = vunpack.c.l.b16 %v242
    %v277 = vunpack.c.l.b16 %v243
    %v278 = vunpack.c.l.b16 %v244
    %v279 = vunpack.c.l.b16 %v245
    %v280 = vunpack.c.l.b16 %v246
    %v281 = vunpack.c.l.b16 %v247
    %v282 = vunpack.c.l.b16 %v248
    %v283 = vunpack.c.l.b16 %v249
    %v284 = vunpack.c.l.b16 %v250
    %v285 = vunpack.c.l.b16 %v251
    %v286 = vpack.c.b16 %v271, %v270
    %v287 = vpack.c.b16 %v273, %v272
    %v288 = vpack.c.b16 %v275, %v274
    %v289 = vpack.c.b16 %v277, %v276
    %v290 = vpack.c.b16 %v279, %v278
    %v291 = vpack.c.b16 %v281, %v280
    %v292 = vpack.c.b16 %v283, %v282
    %v293 = vpack.c.b16 %v285, %v284
    %302 = vmatpush.bf16.msra.mxu0 %v293
    %303 = vmatpush.bf16.msra.mxu0 %v292
    %304 = vmatpush.bf16.msra.mxu0 %v291
    %305 = vmatpush.bf16.msra.mxu0 %v290
    %306 = vmatpush.bf16.msra.mxu0 %v289
    %307 = vmatpush.bf16.msra.mxu0 %v288
    %308 = vmatpush.bf16.msra.mxu0 %v287
    %309 = vmatpush.bf16.msra.mxu0 %v286
    %310 = vmatmul.bf16.gmra.mxu0 %v235
    %v311 = vpop.f32.mrf.mxu0
    %v312 = vadd.f32 %v253, %v311
    %v313 = vpop.f32.mrf.mxu0
    %v314 = vadd.f32 %v253, %v313
    %315 = vdwg.mxu0
    %v316 = vmax.f32 %v312, 0.0
    %v317 = vmax.f32 %v314, 0.0
    %v318 = vpack.c.bf16 %v317, %v316
    %v319 = vld [vmem:[#allocation5 + $0xc0] sm:$0xf]
    %v320 = vld [vmem:[#allocation5 + $0xc4] sm:$0xf]
    %v321 = vld [vmem:[#allocation5 + $0xc8] sm:$0xf]
    %v322 = vld [vmem:[#allocation5 + $0xcc] sm:$0xf]
    %v323 = vld [vmem:[#allocation5 + $0xd0] sm:$0xf]
    %v324 = vld [vmem:[#allocation5 + $0xd4] sm:$0xf]
    %v325 = vld [vmem:[#allocation5 + $0xd8] sm:$0xf]
    %v326 = vld [vmem:[#allocation5 + $0xdc] sm:$0xf]
    %v327 = vld [vmem:[#allocation5 + $0xe0] sm:$0xf]
    %v328 = vld [vmem:[#allocation5 + $0xe4] sm:$0xf]
    %v329 = vld [vmem:[#allocation5 + $0xe8] sm:$0xf]
    %v330 = vld [vmem:[#allocation5 + $0xec] sm:$0xf]
    %v331 = vld [vmem:[#allocation5 + $0xf0] sm:$0xf]
    %v332 = vld [vmem:[#allocation5 + $0xf4] sm:$0xf]
    %v333 = vld [vmem:[#allocation5 + $0xf8] sm:$0xf]
    %v334 = vld [vmem:[#allocation5 + $0xfc] sm:$0xf]
    %v335 = vld [vmem:[#allocation7 + $0x18] sm:$0x1]
    %v336 = vperm.slane %v335, 0
    %v353 = vunpack.c.l.b16 %v319
    %v354 = vunpack.c.l.b16 %v320
    %v355 = vunpack.c.l.b16 %v321
    %v356 = vunpack.c.l.b16 %v322
    %v357 = vunpack.c.l.b16 %v323
    %v358 = vunpack.c.l.b16 %v324
    %v359 = vunpack.c.l.b16 %v325
    %v360 = vunpack.c.l.b16 %v326
    %v361 = vunpack.c.l.b16 %v327
    %v362 = vunpack.c.l.b16 %v328
    %v363 = vunpack.c.l.b16 %v329
    %v364 = vunpack.c.l.b16 %v330
    %v365 = vunpack.c.l.b16 %v331
    %v366 = vunpack.c.l.b16 %v332
    %v367 = vunpack.c.l.b16 %v333
    %v368 = vunpack.c.l.b16 %v334
    %v369 = vpack.c.b16 %v354, %v353
    %v370 = vpack.c.b16 %v356, %v355
    %v371 = vpack.c.b16 %v358, %v357
    %v372 = vpack.c.b16 %v360, %v359
    %v373 = vpack.c.b16 %v362, %v361
    %v374 = vpack.c.b16 %v364, %v363
    %v375 = vpack.c.b16 %v366, %v365
    %v376 = vpack.c.b16 %v368, %v367
    %385 = vmatpush.bf16.msra.mxu0 %v376
    %386 = vmatpush.bf16.msra.mxu0 %v375
    %387 = vmatpush.bf16.msra.mxu0 %v374
    %388 = vmatpush.bf16.msra.mxu0 %v373
    %389 = vmatpush.bf16.msra.mxu0 %v372
    %390 = vmatpush.bf16.msra.mxu0 %v371
    %391 = vmatpush.bf16.msra.mxu0 %v370
    %392 = vmatpush.bf16.msra.mxu0 %v369
    %393 = vmatmul.bf16.gmra.mxu0 %v318
    %v394 = vpop.f32.mrf.mxu0
    %v395 = vadd.f32 %v336, %v394
    %v396 = vpop.f32.mrf.mxu0
    %v397 = vadd.f32 %v336, %v396
    %398 = vdwg.mxu0
    %v399 = vmax.f32 %v395, 0.0
    %v400 = vmax.f32 %v397, 0.0
    %v401 = vpack.c.bf16 %v400, %v399
    %v402 = vld [vmem:[#allocation5 + $0x100] sm:$0xf]
    %v403 = vld [vmem:[#allocation5 + $0x104] sm:$0xf]
    %v404 = vld [vmem:[#allocation5 + $0x108] sm:$0xf]
    %v405 = vld [vmem:[#allocation5 + $0x10c] sm:$0xf]
    %v406 = vld [vmem:[#allocation5 + $0x110] sm:$0xf]
    %v407 = vld [vmem:[#allocation5 + $0x114] sm:$0xf]
    %v408 = vld [vmem:[#allocation5 + $0x118] sm:$0xf]
    %v409 = vld [vmem:[#allocation5 + $0x11c] sm:$0xf]
    %v410 = vld [vmem:[#allocation5 + $0x120] sm:$0xf]
    %v411 = vld [vmem:[#allocation5 + $0x124] sm:$0xf]
    %v412 = vld [vmem:[#allocation5 + $0x128] sm:$0xf]
    %v413 = vld [vmem:[#allocation5 + $0x12c] sm:$0xf]
    %v414 = vld [vmem:[#allocation5 + $0x130] sm:$0xf]
    %v415 = vld [vmem:[#allocation5 + $0x134] sm:$0xf]
    %v416 = vld [vmem:[#allocation5 + $0x138] sm:$0xf]
    %v417 = vld [vmem:[#allocation5 + $0x13c] sm:$0xf]
    %v418 = vld [vmem:[#allocation7 + $0x20] sm:$0x1]
    %v419 = vperm.slane %v418, 0
    %v436 = vunpack.c.l.b16 %v402
    %v437 = vunpack.c.l.b16 %v403
    %v438 = vunpack.c.l.b16 %v404
    %v439 = vunpack.c.l.b16 %v405
    %v440 = vunpack.c.l.b16 %v406
    %v441 = vunpack.c.l.b16 %v407
    %v442 = vunpack.c.l.b16 %v408
    %v443 = vunpack.c.l.b16 %v409
    %v444 = vunpack.c.l.b16 %v410
    %v445 = vunpack.c.l.b16 %v411
    %v446 = vunpack.c.l.b16 %v412
    %v447 = vunpack.c.l.b16 %v413
    %v448 = vunpack.c.l.b16 %v414
    %v449 = vunpack.c.l.b16 %v415
    %v450 = vunpack.c.l.b16 %v416
    %v451 = vunpack.c.l.b16 %v417
    %v452 = vpack.c.b16 %v437, %v436
    %v453 = vpack.c.b16 %v439, %v438
    %v454 = vpack.c.b16 %v441, %v440
    %v455 = vpack.c.b16 %v443, %v442
    %v456 = vpack.c.b16 %v445, %v444
    %v457 = vpack.c.b16 %v447, %v446
    %v458 = vpack.c.b16 %v449, %v448
    %v459 = vpack.c.b16 %v451, %v450
    %468 = vmatpush.bf16.msra.mxu0 %v459
    %469 = vmatpush.bf16.msra.mxu0 %v458
    %470 = vmatpush.bf16.msra.mxu0 %v457
    %471 = vmatpush.bf16.msra.mxu0 %v456
    %472 = vmatpush.bf16.msra.mxu0 %v455
    %473 = vmatpush.bf16.msra.mxu0 %v454
    %474 = vmatpush.bf16.msra.mxu0 %v453
    %475 = vmatpush.bf16.msra.mxu0 %v452
    %476 = vmatmul.bf16.gmra.mxu0 %v401
    %v477 = vpop.f32.mrf.mxu0
    %v478 = vadd.f32 %v419, %v477
    %v479 = vpop.f32.mrf.mxu0
    %v480 = vadd.f32 %v419, %v479
    %481 = vdwg.mxu0
    %v482 = vpack.c.bf16 %v478, %v478
    %v483 = vpack.c.bf16 %v480, %v480
    %484 = vst [vmem:[#allocation8] sm:$0xf] %v482
    %485 = vst [vmem:[#allocation8 + $0x4] sm:$0xf] %v483
    // Predicated region
    $region26: #{tpu_custom_call.1} parent=1 // pred_check
      _
    $region27: #{tpu_custom_call.1} parent=1 // pred_check_branch
      %487 = sbr.rel (0) target = $region29
    $region28: #{tpu_custom_call.1} parent=1 // pred_region
      %489 = vsyncadd [#allocation4], 0
      %s490 = sshll.u32 [#allocation8], 4
      %s491 = int_to_ptr.vmem [resolvable:$true] %s490
      %s492 = sshll.u32 %s3, 4
      %s493 = int_to_ptr.hbm [resolvable:$true] %s492
      %498 = dma.vmem_to_hbm [thread:$0]  %s491, 128, %s493, [#allocation4], 64, 64, 4
    $region29: #{tpu_custom_call.1} parent=1 // pred_fallthru
      _
    // Predicated region
    $region30: #{tpu_custom_call.1} parent=1 // pred_check
      _
    $region31: #{tpu_custom_call.1} parent=1 // pred_check_branch
      %500 = sbr.rel (0) target = $region33
    $region32: #{tpu_custom_call.1} parent=1 // pred_region
      %502 = dma.done [#allocation4], 128
    $region33: #{tpu_custom_call.1} parent=1 // pred_fallthru
      _
    %503 = vsyncpa [#allocation3], 1
    %504 = vsyncpa [#allocation6], 1
    %505 = vsyncpa [#allocation4], 1

</llo_original>
